<compile_context>
chip_gen: v7x
topology: tpu7x:2x2x1
jax: 0.10.0
libtpu: 0.0.40
codegen_flags: <defaults>
</compile_context>

<pallas_src>
import functools

import jax
import jax.numpy as jnp
from jax.experimental import pallas as pl
from jax.experimental.pallas import tpu as pltpu

LANES = 128
MAX_BLOCK_BYTES = 2 << 20      # ~2 MiB per input per pipeline buffer
SINGLE_BLOCK_BYTES = 1 << 20   # below this, a single un-pipelined step is fine


def _round_up(x, m):
    return ((x + m - 1) // m) * m


def _mag_mse_partial_kernel(p_ref, a_ref, out_ref, *, rows, block_rows,
                            blocks_per_chunk):
    c = pl.program_id(0)   # parallel chunk axis (dual-TC on v7x)
    i = pl.program_id(1)   # arbitrary reduction axis within the chunk

    @pl.when(i == 0)
    def _():
        out_ref[...] = jnp.zeros_like(out_ref)

    p = p_ref[...].astype(jnp.float32)
    a = a_ref[...].astype(jnp.float32)

    # Interleaved layout: even lanes = re, odd lanes = im of the same complex
    # number.  Pair-sum squares via an XLU lane roll so even lanes hold |z|^2;
    # odd lanes hold garbage (masked below).
    p2 = p * p
    a2 = a * a
    p_pair = p2 + pltpu.roll(p2, shift=LANES - 1, axis=1)  # rolled[l] = p2[l+1]
    a_pair = a2 + pltpu.roll(a2, shift=LANES - 1, axis=1)

    d = jnp.sqrt(p_pair) - jnp.sqrt(a_pair)
    d2 = d * d

    lane = jax.lax.broadcasted_iota(jnp.int32, (block_rows, LANES), 1)
    mask = (lane & 1) == 0  # keep even lanes only (one per complex element)
    if rows % block_rows != 0:
        # Ragged last block: mask rows past the true extent (data unspecified).
        # Must stay per-step (accumulator rows are shared across blocks); these
        # few VPU ops are free filler under the HBM-bound regime.
        gb = c * blocks_per_chunk + i  # global block index
        row = jax.lax.broadcasted_iota(jnp.int32, (block_rows, LANES), 0)
        mask = jnp.logical_and(mask, (gb * block_rows + row) < rows)

    masked = jnp.where(mask, d2, 0.0)
    # Sublane-group fold into the tiny (8, LANES) resident output block:
    # (block_rows, 128) -> (block_rows//8, 8, 128) keeps vreg tiles intact, so
    # the axis-0 sum is plain VPU vreg adds (no layout change, no XLU).
    out_ref[0] += masked.reshape(block_rows // 8, 8, LANES).sum(axis=0)


def magnitude_mse_loss(pred, actual):
    """mean((|view_as_complex(pred)| - |view_as_complex(actual)|)^2)."""
    assert pred.shape == actual.shape
    assert pred.shape[-1] == 2, "trailing dim must be (re, im)"

    n_complex = pred.size // 2
    itemsize = jnp.dtype(pred.dtype).itemsize
    sub = max(8, 32 // itemsize)        # sublane tile: 8 f32, 16 bf16, 32 int8
    align = sub * LANES

    flat_p = pred.reshape(-1)
    flat_a = actual.reshape(-1)

    # Tiny alignment pad only when strictly needed (zeros are neutral: both
    # tensors padded identically -> |0| - |0| = 0 contribution).
    total = flat_p.size
    if total % align != 0:
        padn = align - (total % align)
        flat_p = jnp.pad(flat_p, (0, padn))
        flat_a = jnp.pad(flat_a, (0, padn))

    rows = flat_p.size // LANES
    p2d = flat_p.reshape(rows, LANES)
    a2d = flat_a.reshape(rows, LANES)

    max_block_rows = MAX_BLOCK_BYTES // (LANES * itemsize)
    single_block_rows = SINGLE_BLOCK_BYTES // (LANES * itemsize)

    if rows <= single_block_rows:
        # <= ~1 MiB per input: one block; per-step overhead would dominate any
        # pipelining gain.
        block_rows = rows
        num_chunks = 1
    else:
        # Force >=4 grid steps so compute pipelines under DMA; cap block size.
        block_rows = min(max_block_rows,
                         max(512, _round_up(pl.cdiv(rows, 4), sub)))
        blocks_total = pl.cdiv(rows, block_rows)
        num_chunks = 1
        if blocks_total >= 4:
            if blocks_total % 2 == 0:
                num_chunks = 2   # engage 2nd TensorCore on v7x (no-op on v5e/v6e)
            else:
                # Nudge the block size so the block count becomes even.
                alt = _round_up(pl.cdiv(rows, blocks_total + 1), sub)
                if alt >= sub and pl.cdiv(rows, alt) % 2 == 0:
                    block_rows = alt
                    num_chunks = 2

    blocks_total = pl.cdiv(rows, block_rows)
    blocks_per_chunk = blocks_total // num_chunks  # exact when num_chunks == 2

    kernel = functools.partial(
        _mag_mse_partial_kernel,
        rows=rows,
        block_rows=block_rows,
        blocks_per_chunk=blocks_per_chunk,
    )

    partials = pl.pallas_call(
        kernel,
        out_shape=jax.ShapeDtypeStruct((num_chunks, 8, LANES), jnp.float32),
        grid_spec=pltpu.PrefetchScalarGridSpec(
            num_scalar_prefetch=0,
            grid=(num_chunks, blocks_per_chunk),
            in_specs=[
                pl.BlockSpec((block_rows, LANES),
                             lambda c, i, bpc=blocks_per_chunk: (c * bpc + i, 0)),
                pl.BlockSpec((block_rows, LANES),
                             lambda c, i, bpc=blocks_per_chunk: (c * bpc + i, 0)),
            ],
            out_specs=pl.BlockSpec((1, 8, LANES), lambda c, i: (c, 0, 0)),
        ),
        compiler_params=pltpu.CompilerParams(
            dimension_semantics=("parallel", "arbitrary"),
        ),
    )(p2d, a2d)

    # Final cross-lane reduction of the tiny (num_chunks, 8, 128) partials and
    # the mean are done in plain JAX glue.
    sq_sum = jnp.sum(partials)
    return (sq_sum / jnp.float32(n_complex)).astype(pred.dtype)


if __name__ == "__main__":
    key = jax.random.PRNGKey(0)
    k1, k2 = jax.random.split(key)
    # Complex tensors viewed as real: batch=2, channels=4, 16x16 spatial,
    # trailing dim 2 = (re, im).
    pred = jax.random.normal(k1, (2, 4, 16, 16, 2), dtype=jnp.float32)
    actual = jax.random.normal(k2, (2, 4, 16, 16, 2), dtype=jnp.float32)

    loss = magnitude_mse_loss(pred, actual)
    jax.block_until_ready(loss)

    # Reference in plain JAX (mirrors torch.abs(torch.view_as_complex(x))).
    mag_p = jnp.abs(jax.lax.complex(pred[..., 0], pred[..., 1]))
    mag_a = jnp.abs(jax.lax.complex(actual[..., 0], actual[..., 1]))
    ref = jnp.mean((mag_p - mag_a) ** 2)
    assert jnp.allclose(loss, ref, rtol=1e-5, atol=1e-6), (loss, ref)

    print("KERNEL_OK")
</pallas_src>

<mosaic_0001>
module attributes {stable_mosaic.version = 11 : i64} {
  func.func @_mag_mse_partial_kernel(%arg0: i32, %arg1: i32, %arg2: memref<32x128xf32, #tpu.memory_space<vmem>>, %arg3: memref<32x128xf32, #tpu.memory_space<vmem>>, %arg4: memref<1x8x128xf32, #tpu.memory_space<vmem>>) attributes {dimension_semantics = [#tpu.dimension_semantics<parallel>, #tpu.dimension_semantics<arbitrary>], iteration_bounds = array<i64: 1, 1>, scalar_prefetch = 0 : i64, scratch_operands = 0 : i64, tpu.core_type = #tpu.core_type<tc>, window_params = [{transform_indices = @transform_0, window_bounds = array<i64: 32, 128>}, {transform_indices = @transform_1, window_bounds = array<i64: 32, 128>}, {transform_indices = @transform_2, window_bounds = array<i64: 1, 8, 128>}]} {
    %c0_i32 = arith.constant 0 : i32
    %0 = arith.cmpi eq, %arg1, %c0_i32 : i32
    %1 = arith.extui %0 : i1 to i32
    %c0_i32_0 = arith.constant 0 : i32
    %2 = arith.cmpi ne, %1, %c0_i32_0 : i32
    scf.if %2 {
      %cst_13 = arith.constant 0.000000e+00 : f32
      %30 = vector.broadcast %cst_13 : f32 to vector<1x8x128xf32>
      %c0_14 = arith.constant 0 : index
      %c0_15 = arith.constant 0 : index
      %c0_16 = arith.constant 0 : index
      %31 = vector.load %arg4[%c0_14, %c0_15, %c0_16] : memref<1x8x128xf32, #tpu.memory_space<vmem>>, vector<1x8x128xf32>
      tpu.vector_store %arg4[%c0_14, %c0_15, %c0_16], %30 {strides = array<i32>} : memref<1x8x128xf32, #tpu.memory_space<vmem>>, vector<1x8x128xf32>,
    } else {
    }
    %c0 = arith.constant 0 : index
    %c0_1 = arith.constant 0 : index
    %3 = vector.load %arg2[%c0, %c0_1] : memref<32x128xf32, #tpu.memory_space<vmem>>, vector<32x128xf32>
    %c0_2 = arith.constant 0 : index
    %c0_3 = arith.constant 0 : index
    %4 = vector.load %arg3[%c0_2, %c0_3] : memref<32x128xf32, #tpu.memory_space<vmem>>, vector<32x128xf32>
    %5 = arith.mulf %3, %3 : vector<32x128xf32>
    %6 = arith.mulf %4, %4 : vector<32x128xf32>
    %c127_i32 = arith.constant 127 : i32
    %7 = tpu.dynamic_rotate %5 by %c127_i32 dim 1 : vector<32x128xf32>, i32 -> vector<32x128xf32>
    %8 = arith.addf %5, %7 : vector<32x128xf32>
    %c127_i32_4 = arith.constant 127 : i32
    %9 = tpu.dynamic_rotate %6 by %c127_i32_4 dim 1 : vector<32x128xf32>, i32 -> vector<32x128xf32>
    %10 = arith.addf %6, %9 : vector<32x128xf32>
    %11 = math.sqrt %8 : vector<32x128xf32>
    %12 = math.sqrt %10 : vector<32x128xf32>
    %13 = arith.subf %11, %12 : vector<32x128xf32>
    %14 = arith.mulf %13, %13 : vector<32x128xf32>
    %15 = tpu.iota {dimensions = array<i32: 1>} : vector<32x128xi32>
    %c1_i32 = arith.constant 1 : i32
    %16 = vector.broadcast %c1_i32 : i32 to vector<32x128xi32>
    %17 = arith.andi %15, %16 : vector<32x128xi32>
    %c0_i32_5 = arith.constant 0 : i32
    %18 = vector.broadcast %c0_i32_5 : i32 to vector<32x128xi32>
    %19 = arith.cmpi eq, %17, %18 : vector<32x128xi32>
    %cst = arith.constant 0.000000e+00 : f32
    %20 = vector.broadcast %cst : f32 to vector<32x128xf32>
    %21 = arith.select %19, %14, %20 : vector<32x128xi1>, vector<32x128xf32>
    %c0_6 = arith.constant 0 : index
    %c0_7 = arith.constant 0 : index
    %c0_8 = arith.constant 0 : index
    %22 = vector.load %arg4[%c0_6, %c0_7, %c0_8] : memref<1x8x128xf32, #tpu.memory_space<vmem>>, vector<1x8x128xf32>
    %23 = vector.shape_cast %22 : vector<1x8x128xf32> to vector<8x128xf32>
    %24 = vector.shape_cast %21 : vector<32x128xf32> to vector<4x8x128xf32>
    %cst_9 = arith.constant dense<0.000000e+00> : vector<8x128xf32>
    %25 = vector.multi_reduction <add>, %24, %cst_9 [0] : vector<4x8x128xf32> to vector<8x128xf32>
    %26 = arith.addf %23, %25 : vector<8x128xf32>
    %c0_10 = arith.constant 0 : index
    %c0_11 = arith.constant 0 : index
    %c0_12 = arith.constant 0 : index
    %27 = vector.load %arg4[%c0_10, %c0_11, %c0_12] : memref<1x8x128xf32, #tpu.memory_space<vmem>>, vector<1x8x128xf32>
    %28 = vector.shape_cast %27 : vector<1x8x128xf32> to vector<8x128xf32>
    %29 = vector.shape_cast %26 : vector<8x128xf32> to vector<1x8x128xf32>
    tpu.vector_store %arg4[%c0_10, %c0_11, %c0_12], %29 {strides = array<i32>} : memref<1x8x128xf32, #tpu.memory_space<vmem>>, vector<1x8x128xf32>,
    return
  }
  func.func @transform_0(%arg0: i32, %arg1: i32) -> (i32, i32) {
    %c1_i32 = arith.constant 1 : i32
    %0 = arith.muli %arg0, %c1_i32 : i32
    %1 = arith.addi %0, %arg1 : i32
    %c0_i32 = arith.constant 0 : i32
    %c0_i32_0 = arith.constant 0 : i32
    return %1, %c0_i32 : i32, i32
  }
  func.func @transform_1(%arg0: i32, %arg1: i32) -> (i32, i32) {
    %c1_i32 = arith.constant 1 : i32
    %0 = arith.muli %arg0, %c1_i32 : i32
    %1 = arith.addi %0, %arg1 : i32
    %c0_i32 = arith.constant 0 : i32
    %c0_i32_0 = arith.constant 0 : i32
    return %1, %c0_i32 : i32, i32
  }
  func.func @transform_2(%arg0: i32, %arg1: i32) -> (i32, i32, i32) {
    %c0_i32 = arith.constant 0 : i32
    %c0_i32_0 = arith.constant 0 : i32
    %c0_i32_1 = arith.constant 0 : i32
    return %arg0, %c0_i32, %c0_i32_0 : i32, i32, i32
  }
}

</mosaic_0001>

<llo_original>
// kernel: tpu_custom_call.1
$region0: #{tpu_custom_call.1}
  #allocation0 [shape = 'u32[]', space=smem, size = 0x4, offset = 0x4, fixed_abs, tag = 'smem constant byte address 0x4 - core index']
  #allocation1 [shape = 'u32[144,128]{1,0:T(1,128)}', space=vmem, size = 0x12000, scoped, tag = 'internal scratch']
  %s0 = inlined_call_operand.hbm [shape: f32[32,128], index: 0, kind: input, shape index: {}]
  %s1 = inlined_call_operand.hbm [shape: f32[32,128], index: 1, kind: input, shape index: {}]
  %s2 = inlined_call_operand.hbm [shape: f32[1,8,128], index: 2, kind: output, shape index: {}]
  %s3 = sld [smem:[#allocation0]]
  $region30: #{tpu_custom_call.1} parent=0
    _
  %s5 = ssub.s32 1, %s3
  %s6 = scalar_select 0, %s5, %s3
  $region1: #{tpu_custom_call.1} parent=0
    #allocation2 [shape = 'u8[16384]{0}', space=vmem, size = 0x4000, scoped, tag = 'input window, operand 0, single buffered']
    #allocation3 [shape = 's32[1]{0}', space=sflag, size = 0x4, scoped, tag = 'scoped memory for tpu_custom_call.1']
    #allocation4 [shape = 's32[1]{0}', space=sflag, size = 0x4, scoped, tag = 'scoped memory for tpu_custom_call.1']
    #allocation5 [shape = 'u8[16384]{0}', space=vmem, size = 0x4000, scoped, tag = 'input window, operand 1, single buffered']
    #allocation6 [shape = 's32[1]{0}', space=sflag, size = 0x4, scoped, tag = 'scoped memory for tpu_custom_call.1']
    #allocation7 [shape = 'u8[4096]{0}', space=vmem, size = 0x1000, scoped, tag = 'output window, operand 0, single buffered']
    %7 = vsyncpa [#allocation3], 0
    %8 = vsyncpa [#allocation6], 0
    %9 = vsyncpa [#allocation4], 0
    // Predicated region
    $region2: #{tpu_custom_call.1} parent=1 // pred_check
      _
    $region3: #{tpu_custom_call.1} parent=1 // pred_check_branch
      %11 = sbr.rel (0) target = $region5
    $region4: #{tpu_custom_call.1} parent=1 // pred_region
      %s12 = sadd.s32 0, 0
      %s13 = smul.u32 4, %s12
      %s15 = ssub.s32 512, 512
      %16 = vsyncadd [#allocation3], %s15
      %s17 = smul.addr %s13, 128
      %s18 = scalar_lea.hbm %s0, %s17
      %s19 = sshll.u32 [#allocation2], 4
      %s20 = int_to_ptr.vmem [resolvable:$true] %s19
      %25 = dma.hbm_to_vmem [thread:$0]  %s18, 512, %s20, [#allocation3], 128, 128, 8
    $region5: #{tpu_custom_call.1} parent=1 // pred_fallthru
      _
    // Predicated region
    $region6: #{tpu_custom_call.1} parent=1 // pred_check
      _
    $region7: #{tpu_custom_call.1} parent=1 // pred_check_branch
      %27 = sbr.rel (0) target = $region9
    $region8: #{tpu_custom_call.1} parent=1 // pred_region
      %s28 = sadd.s32 0, 0
      %s29 = smul.u32 4, %s28
      %s31 = ssub.s32 512, 512
      %32 = vsyncadd [#allocation6], %s31
      %s33 = smul.addr %s29, 128
      %s34 = scalar_lea.hbm %s1, %s33
      %s35 = sshll.u32 [#allocation5], 4
      %s36 = int_to_ptr.vmem [resolvable:$true] %s35
      %41 = dma.hbm_to_vmem [thread:$0]  %s34, 512, %s36, [#allocation6], 128, 128, 8
    $region9: #{tpu_custom_call.1} parent=1 // pred_fallthru
      _
    // Predicated region
    $region10: #{tpu_custom_call.1} parent=1 // pred_check
      _
    $region11: #{tpu_custom_call.1} parent=1 // pred_check_branch
      %43 = sbr.rel (0) target = $region13
    $region12: #{tpu_custom_call.1} parent=1 // pred_region
      %44 = dma.done [#allocation3], 512
    $region13: #{tpu_custom_call.1} parent=1 // pred_fallthru
      _
    // Predicated region
    $region14: #{tpu_custom_call.1} parent=1 // pred_check
      _
    $region15: #{tpu_custom_call.1} parent=1 // pred_check_branch
      %46 = sbr.rel (0) target = $region17
    $region16: #{tpu_custom_call.1} parent=1 // pred_region
      %47 = dma.done [#allocation6], 512
    $region17: #{tpu_custom_call.1} parent=1 // pred_fallthru
      _
    %s48 = sadd.s32 0, 0
    %s49 = smul.u32 4, %s48
    %s50 = sadd.s32 0, 0
    %s51 = smul.u32 4, %s50
    %p52 = scmp.eq.s32.totalorder 0, 0
    // Predicated region
    $region18: #{tpu_custom_call.1} parent=1 // pred_check
      %p53 = pneg %p52
    $region19: #{tpu_custom_call.1} parent=1 // pred_check_branch
      %55 = sbr.rel (%p53) target = $region21
    $region20: #{tpu_custom_call.1} parent=1 // pred_region
      %56 = vst [vmem:[#allocation7] sm:$0xff] 0.0
    $region21: #{tpu_custom_call.1} parent=1 // pred_fallthru
      _
    %v57 = vld [vmem:[#allocation2] sm:$0xff]
    %v58 = vld [vmem:[#allocation2 + $0x8] sm:$0xff]
    %v59 = vld [vmem:[#allocation2 + $0x10] sm:$0xff]
    %v60 = vld [vmem:[#allocation2 + $0x18] sm:$0xff]
    %v61 = vld [vmem:[#allocation5] sm:$0xff]
    %v62 = vld [vmem:[#allocation5 + $0x8] sm:$0xff]
    %v63 = vld [vmem:[#allocation5 + $0x10] sm:$0xff]
    %v64 = vld [vmem:[#allocation5 + $0x18] sm:$0xff]
    %v65 = vmul.f32 %v57, %v57
    %v66 = vmul.f32 %v58, %v58
    %v67 = vmul.f32 %v59, %v59
    %v68 = vmul.f32 %v60, %v60
    %v69 = vmul.f32 %v61, %v61
    %v70 = vmul.f32 %v62, %v62
    %v71 = vmul.f32 %v63, %v63
    %v72 = vmul.f32 %v64, %v64
    %73 = vrot.lane.b32.xlu0 %v65, 127
    %v74 = vpop.permute.xlu0 %73
    %75 = vrot.lane.b32.xlu0 %v66, 127
    %v76 = vpop.permute.xlu0 %75
    %77 = vrot.lane.b32.xlu0 %v67, 127
    %v78 = vpop.permute.xlu0 %77
    %79 = vrot.lane.b32.xlu0 %v68, 127
    %v80 = vpop.permute.xlu0 %79
    %v81 = vadd.f32 %v65, %v74
    %v82 = vadd.f32 %v66, %v76
    %v83 = vadd.f32 %v67, %v78
    %v84 = vadd.f32 %v68, %v80
    %85 = vrot.lane.b32.xlu0 %v69, 127
    %v86 = vpop.permute.xlu0 %85
    %87 = vrot.lane.b32.xlu0 %v70, 127
    %v88 = vpop.permute.xlu0 %87
    %89 = vrot.lane.b32.xlu0 %v71, 127
    %v90 = vpop.permute.xlu0 %89
    %91 = vrot.lane.b32.xlu0 %v72, 127
    %v92 = vpop.permute.xlu0 %91
    %v93 = vadd.f32 %v69, %v86
    %v94 = vadd.f32 %v70, %v88
    %v95 = vadd.f32 %v71, %v90
    %v96 = vadd.f32 %v72, %v92
    %v97 = vrsqrt.pop %v81
    %v98 = vmul.f32 %v81, %v97
    %vm99 = vcmp.eq.f32.partialorder %v81, inf
    %v100 = vsel %vm99, %v81, %v98
    %vm101 = vcmp.eq.f32.partialorder %v81, 0.0
    %v102 = vand.u32 %v81, 2147483648
    %v103 = vsel %vm101, %v102, %v100
    %v104 = vrsqrt.pop %v82
    %v105 = vmul.f32 %v82, %v104
    %vm106 = vcmp.eq.f32.partialorder %v82, inf
    %v107 = vsel %vm106, %v82, %v105
    %vm108 = vcmp.eq.f32.partialorder %v82, 0.0
    %v109 = vand.u32 %v82, 2147483648
    %v110 = vsel %vm108, %v109, %v107
    %v111 = vrsqrt.pop %v83
    %v112 = vmul.f32 %v83, %v111
    %vm113 = vcmp.eq.f32.partialorder %v83, inf
    %v114 = vsel %vm113, %v83, %v112
    %vm115 = vcmp.eq.f32.partialorder %v83, 0.0
    %v116 = vand.u32 %v83, 2147483648
    %v117 = vsel %vm115, %v116, %v114
    %v118 = vrsqrt.pop %v84
    %v119 = vmul.f32 %v84, %v118
    %vm120 = vcmp.eq.f32.partialorder %v84, inf
    %v121 = vsel %vm120, %v84, %v119
    %vm122 = vcmp.eq.f32.partialorder %v84, 0.0
    %v123 = vand.u32 %v84, 2147483648
    %v124 = vsel %vm122, %v123, %v121
    %v125 = vrsqrt.pop %v93
    %v126 = vmul.f32 %v93, %v125
    %vm127 = vcmp.eq.f32.partialorder %v93, inf
    %v128 = vsel %vm127, %v93, %v126
    %vm129 = vcmp.eq.f32.partialorder %v93, 0.0
    %v130 = vand.u32 %v93, 2147483648
    %v131 = vsel %vm129, %v130, %v128
    %v132 = vrsqrt.pop %v94
    %v133 = vmul.f32 %v94, %v132
    %vm134 = vcmp.eq.f32.partialorder %v94, inf
    %v135 = vsel %vm134, %v94, %v133
    %vm136 = vcmp.eq.f32.partialorder %v94, 0.0
    %v137 = vand.u32 %v94, 2147483648
    %v138 = vsel %vm136, %v137, %v135
    %v139 = vrsqrt.pop %v95
    %v140 = vmul.f32 %v95, %v139
    %vm141 = vcmp.eq.f32.partialorder %v95, inf
    %v142 = vsel %vm141, %v95, %v140
    %vm143 = vcmp.eq.f32.partialorder %v95, 0.0
    %v144 = vand.u32 %v95, 2147483648
    %v145 = vsel %vm143, %v144, %v142
    %v146 = vrsqrt.pop %v96
    %v147 = vmul.f32 %v96, %v146
    %vm148 = vcmp.eq.f32.partialorder %v96, inf
    %v149 = vsel %vm148, %v96, %v147
    %vm150 = vcmp.eq.f32.partialorder %v96, 0.0
    %v151 = vand.u32 %v96, 2147483648
    %v152 = vsel %vm150, %v151, %v149
    %v153 = vsub.f32 %v103, %v131
    %v154 = vsub.f32 %v110, %v138
    %v155 = vsub.f32 %v117, %v145
    %v156 = vsub.f32 %v124, %v152
    %v157 = vmul.f32 %v153, %v153
    %v158 = vmul.f32 %v154, %v154
    %v159 = vmul.f32 %v155, %v155
    %v160 = vmul.f32 %v156, %v156
    %v161 = vlaneseq
    %v162 = vand.u32 %v161, 127
    %v163 = vand.u32 %v162, 1
    %vm164 = vcmp.eq.s32.totalorder %v163, 0
    %v165 = vsel %vm164, %v157, 0.0
    %v166 = vsel %vm164, %v158, 0.0
    %v167 = vsel %vm164, %v159, 0.0
    %v168 = vsel %vm164, %v160, 0.0
    %v169 = vld [vmem:[#allocation7] sm:$0xff]
    %v170 = vadd.f32 %v165, %v166
    %v171 = vadd.f32 %v170, %v167
    %v172 = vadd.f32 %v171, %v168
    %v173 = vadd.f32 %v169, %v172
    %174 = vst [vmem:[#allocation7] sm:$0xff] %v173
    // Predicated region
    $region22: #{tpu_custom_call.1} parent=1 // pred_check
      _
    $region23: #{tpu_custom_call.1} parent=1 // pred_check_branch
      %176 = sbr.rel (0) target = $region25
    $region24: #{tpu_custom_call.1} parent=1 // pred_region
      %s178 = ssub.s32 128, 128
      %179 = vsyncadd [#allocation4], %s178
      %s181 = sshll.u32 [#allocation7], 4
      %s182 = int_to_ptr.vmem [resolvable:$true] %s181
      %184 = dma.vmem_to_hbm [thread:$0]  %s182, 128, %s2, [#allocation4]
    $region25: #{tpu_custom_call.1} parent=1 // pred_fallthru
      _
    // Predicated region
    $region26: #{tpu_custom_call.1} parent=1 // pred_check
      _
    $region27: #{tpu_custom_call.1} parent=1 // pred_check_branch
      %186 = sbr.rel (0) target = $region29
    $region28: #{tpu_custom_call.1} parent=1 // pred_region
      %187 = dma.done [#allocation4], 128
    $region29: #{tpu_custom_call.1} parent=1 // pred_fallthru
      _
    %188 = vsyncpa [#allocation3], 1
    %189 = vsyncpa [#allocation6], 1
    %190 = vsyncpa [#allocation4], 1

</llo_original>
